<compile_context>
chip_gen: v7x
topology: tpu7x:2x2x1
jax: 0.10.0
libtpu: 0.0.40
codegen_flags: <defaults>
</compile_context>

<pallas_src>
import functools

import jax
import jax.numpy as jnp
from jax.experimental import pallas as pl
from jax.experimental.pallas import tpu as pltpu


# --------------------------- fused single-call path ---------------------------

def _bn_fused_kernel(x_ref, gamma_ref, beta_ref, o_ref, *, eps, inv_count):
    """Whole (N, C, HW) slab resident in VMEM: stats + normalize + affine."""
    x = x_ref[...].astype(jnp.float32)                     # (N, C, HW)
    s = jnp.sum(x, axis=2, keepdims=True)                  # (N, C, 1) lane reduce
    s = jnp.sum(s, axis=0, keepdims=True)                  # (1, C, 1)
    sq = jnp.sum(x * x, axis=2, keepdims=True)
    sq = jnp.sum(sq, axis=0, keepdims=True)
    mean = s * inv_count
    var = sq * inv_count - mean * mean                     # biased variance
    inv_std = jax.lax.rsqrt(var + eps)
    scale = gamma_ref[...] * inv_std                       # (1, C, 1)
    shift = beta_ref[...] - mean * scale
    o_ref[...] = (x * scale + shift).astype(o_ref.dtype)


def _bn_fused(x3d, gamma, beta, eps, count):
    N, C, HW = x3d.shape
    gamma3d = gamma.reshape(1, C, 1).astype(jnp.float32)
    beta3d = beta.reshape(1, C, 1).astype(jnp.float32)
    itemsize = jnp.dtype(x3d.dtype).itemsize
    cost = pl.CostEstimate(
        flops=5 * N * C * HW + 8 * C,
        transcendentals=C,
        bytes_accessed=2 * N * C * HW * itemsize + 2 * C * 4,
    )
    vmem = pl.BlockSpec(memory_space=pltpu.MemorySpace.VMEM)
    return pl.pallas_call(
        functools.partial(_bn_fused_kernel, eps=float(eps),
                          inv_count=1.0 / float(count)),
        out_shape=jax.ShapeDtypeStruct((N, C, HW), x3d.dtype),
        in_specs=[vmem, vmem, vmem],
        out_specs=vmem,
        compiler_params=pltpu.CompilerParams(vmem_limit_bytes=32 << 20),
        cost_estimate=cost,
    )(x3d, gamma3d, beta3d)


# --------------------------- two-pass streaming path --------------------------

def _bn_stats_kernel(x_ref, gamma_ref, beta_ref, scale_ref, shift_ref,
                     sum_ref, sq_ref, *, eps, inv_count, hw, hw_tile):
    """Accumulate per-channel sum / sumsq; finalize fused scale/shift."""
    n = pl.program_id(0)
    t = pl.program_id(1)

    @pl.when((n == 0) & (t == 0))
    def _init():
        sum_ref[...] = jnp.zeros_like(sum_ref)
        sq_ref[...] = jnp.zeros_like(sq_ref)

    x = x_ref[...].astype(jnp.float32)                     # (C, hw_tile)
    if hw % hw_tile != 0:
        # Ragged last lane tile: block extends past the array end -> mask
        # (jnp.where, not mask*x, so OOB NaN/Inf garbage cannot poison sums).
        lane = jax.lax.broadcasted_iota(jnp.int32, x.shape, 1)
        x = jnp.where(lane < (hw - t * hw_tile), x, 0.0)
    sum_ref[...] += jnp.sum(x, axis=1, keepdims=True)      # (C, 1)
    sq_ref[...] += jnp.sum(x * x, axis=1, keepdims=True)   # (C, 1)

    @pl.when((n == pl.num_programs(0) - 1) & (t == pl.num_programs(1) - 1))
    def _finalize():
        mean = sum_ref[...] * inv_count                    # (C, 1)
        var = sq_ref[...] * inv_count - mean * mean        # biased variance
        inv_std = jax.lax.rsqrt(var + eps)
        scale = gamma_ref[...] * inv_std
        scale_ref[...] = scale
        shift_ref[...] = beta_ref[...] - mean * scale


def _bn_apply_kernel(x_ref, scale_ref, shift_ref, o_ref):
    """y = x * scale + shift per channel (channels on sublanes)."""
    x = x_ref[...].astype(jnp.float32)                     # (C, hw_tile)
    o_ref[...] = (x * scale_ref[...] + shift_ref[...]).astype(o_ref.dtype)


def _bn_two_pass(x3d, gamma, beta, eps, count, hw_target):
    N, C, HW = x3d.shape
    gamma2d = gamma.reshape(C, 1).astype(jnp.float32)
    beta2d = beta.reshape(C, 1).astype(jnp.float32)
    itemsize = jnp.dtype(x3d.dtype).itemsize

    assert hw_target % 128 == 0, "hw_target must be a multiple of 128"
    # Either the full spatial extent (always legal) or a bounded 128-multiple
    # lane tile; the ragged last tile is masked in the stats kernel and the
    # apply pass relies on Pallas' masked writeback for the partial block.
    hw_tile = HW if HW <= hw_target else hw_target
    n_hw = pl.cdiv(HW, hw_tile)

    # --- pass 1: per-channel statistics -> fused (scale, shift) ---
    stats_cost = pl.CostEstimate(
        flops=3 * N * C * HW + 8 * C,
        transcendentals=C,
        bytes_accessed=N * C * HW * itemsize + 4 * C * 4,
    )
    scale, shift = pl.pallas_call(
        functools.partial(_bn_stats_kernel, eps=float(eps),
                          inv_count=1.0 / float(count), hw=HW, hw_tile=hw_tile),
        out_shape=(jax.ShapeDtypeStruct((C, 1), jnp.float32),
                   jax.ShapeDtypeStruct((C, 1), jnp.float32)),
        grid=(N, n_hw),
        in_specs=[
            pl.BlockSpec((None, C, hw_tile), lambda n, t: (n, 0, t)),
            pl.BlockSpec((C, 1), lambda n, t: (0, 0)),
            pl.BlockSpec((C, 1), lambda n, t: (0, 0)),
        ],
        out_specs=(pl.BlockSpec((C, 1), lambda n, t: (0, 0)),
                   pl.BlockSpec((C, 1), lambda n, t: (0, 0))),
        scratch_shapes=[pltpu.VMEM((C, 1), jnp.float32),
                        pltpu.VMEM((C, 1), jnp.float32)],
        compiler_params=pltpu.CompilerParams(
            dimension_semantics=("arbitrary", "arbitrary"),
            vmem_limit_bytes=32 << 20),
        cost_estimate=stats_cost,
    )(x3d, gamma2d, beta2d)

    # --- pass 2: streaming normalize + affine (fully parallel) ---
    apply_cost = pl.CostEstimate(
        flops=2 * N * C * HW,
        transcendentals=0,
        bytes_accessed=2 * N * C * HW * itemsize + 2 * C * 4,
    )
    out3d = pl.pallas_call(
        _bn_apply_kernel,
        out_shape=jax.ShapeDtypeStruct((N, C, HW), x3d.dtype),
        grid=(N, n_hw),
        in_specs=[
            pl.BlockSpec((None, C, hw_tile), lambda n, t: (n, 0, t)),
            pl.BlockSpec((C, 1), lambda n, t: (0, 0)),
            pl.BlockSpec((C, 1), lambda n, t: (0, 0)),
        ],
        out_specs=pl.BlockSpec((None, C, hw_tile), lambda n, t: (n, 0, t)),
        compiler_params=pltpu.CompilerParams(
            dimension_semantics=("parallel", "parallel"),
            vmem_limit_bytes=32 << 20),
        cost_estimate=apply_cost,
    )(x3d, scale, shift)
    return out3d


# ----------------------------------- wrapper ----------------------------------

# Gate for the fused path on input bytes; with f32 working copies the fused
# kernel's VMEM footprint is a small multiple of this, safe on every
# generation (incl. v7x's 64 MiB physical VMEM).
_FUSED_INPUT_BYTES_LIMIT = 4 << 20


def batchnorm2d_pallas(x_nchw, gamma, beta, eps=1e-3, *,
                       force_two_pass=False, hw_target=2048):
    """x_nchw: (N, C, H, W); gamma, beta: (C,). Returns (N, C, H, W)."""
    N, C, H, W = x_nchw.shape
    HW = H * W
    x3d = x_nchw.reshape(N, C, HW)                         # free reshape (contiguous)
    count = N * HW
    in_bytes = N * C * HW * jnp.dtype(x3d.dtype).itemsize

    if (not force_two_pass) and in_bytes <= _FUSED_INPUT_BYTES_LIMIT:
        out3d = _bn_fused(x3d, gamma, beta, eps, count)
    else:
        out3d = _bn_two_pass(x3d, gamma, beta, eps, count, hw_target)
    return out3d.reshape(N, C, H, W)


def _reference_bn(x_nchw, gamma, beta, eps=1e-3):
    x = x_nchw.astype(jnp.float32)
    mean = jnp.mean(x, axis=(0, 2, 3), keepdims=True)
    var = jnp.mean((x - mean) ** 2, axis=(0, 2, 3), keepdims=True)
    g = gamma.reshape(1, -1, 1, 1)
    b = beta.reshape(1, -1, 1, 1)
    return (x - mean) * jax.lax.rsqrt(var + eps) * g + b


if __name__ == "__main__":
    key = jax.random.PRNGKey(0)
    kx, kg, kb, kx2 = jax.random.split(key, 4)

    C = 192  # BatchNorm2d(192)
    # Synthetic affine params (not identity, so the affine path is exercised).
    gamma = 1.0 + 0.1 * jax.random.normal(kg, (C,), dtype=jnp.float32)
    beta = 0.1 * jax.random.normal(kb, (C,), dtype=jnp.float32)

    # Module's shape: [1, 192, 14, 14] -> fused single-kernel path.
    x = jax.random.normal(kx, (1, C, 14, 14), dtype=jnp.float32)
    out = jax.block_until_ready(batchnorm2d_pallas(x, gamma, beta, eps=1e-3))
    ref = _reference_bn(x, gamma, beta, eps=1e-3)
    assert out.shape == x.shape
    assert jnp.allclose(out, ref, atol=1e-4, rtol=1e-4)

    # Exercise the large-shape two-pass path at a small size by forcing it:
    # multi-step grid accumulation + ragged last lane tile (HW=400, tile=128).
    x2 = jax.random.normal(kx2, (2, C, 20, 20), dtype=jnp.float32)
    out2 = jax.block_until_ready(
        batchnorm2d_pallas(x2, gamma, beta, eps=1e-3,
                           force_two_pass=True, hw_target=128))
    ref2 = _reference_bn(x2, gamma, beta, eps=1e-3)
    assert jnp.allclose(out2, ref2, atol=1e-4, rtol=1e-4)

    print("KERNEL_OK")
</pallas_src>

<mosaic_0001>
module attributes {stable_mosaic.version = 11 : i64} {
  func.func @_bn_fused_kernel(%arg0: memref<1x192x196xf32, #tpu.memory_space<vmem>>, %arg1: memref<1x192x1xf32, #tpu.memory_space<vmem>>, %arg2: memref<1x192x1xf32, #tpu.memory_space<vmem>>, %arg3: memref<1x192x196xf32, #tpu.memory_space<vmem>>) attributes {dimension_semantics = [], scalar_prefetch = 0 : i64, scratch_operands = 0 : i64, tpu.core_type = #tpu.core_type<tc>} {
    %c0 = arith.constant 0 : index
    %c0_0 = arith.constant 0 : index
    %c0_1 = arith.constant 0 : index
    %0 = vector.load %arg0[%c0, %c0_0, %c0_1] : memref<1x192x196xf32, #tpu.memory_space<vmem>>, vector<1x192x196xf32>
    %cst = arith.constant dense<0.000000e+00> : vector<1x192xf32>
    %1 = vector.multi_reduction <add>, %0, %cst [2] : vector<1x192x196xf32> to vector<1x192xf32>
    %2 = vector.shape_cast %1 : vector<1x192xf32> to vector<1x192x1xf32>
    %cst_2 = arith.constant dense<0.000000e+00> : vector<192x1xf32>
    %3 = vector.multi_reduction <add>, %2, %cst_2 [0] : vector<1x192x1xf32> to vector<192x1xf32>
    %4 = vector.shape_cast %3 : vector<192x1xf32> to vector<1x192x1xf32>
    %5 = arith.mulf %0, %0 : vector<1x192x196xf32>
    %cst_3 = arith.constant dense<0.000000e+00> : vector<1x192xf32>
    %6 = vector.multi_reduction <add>, %5, %cst_3 [2] : vector<1x192x196xf32> to vector<1x192xf32>
    %7 = vector.shape_cast %6 : vector<1x192xf32> to vector<1x192x1xf32>
    %cst_4 = arith.constant dense<0.000000e+00> : vector<192x1xf32>
    %8 = vector.multi_reduction <add>, %7, %cst_4 [0] : vector<1x192x1xf32> to vector<192x1xf32>
    %9 = vector.shape_cast %8 : vector<192x1xf32> to vector<1x192x1xf32>
    %cst_5 = arith.constant 0.00510204071 : f32
    %10 = vector.broadcast %cst_5 : f32 to vector<1x192x1xf32>
    %11 = arith.mulf %4, %10 : vector<1x192x1xf32>
    %cst_6 = arith.constant 0.00510204071 : f32
    %12 = vector.broadcast %cst_6 : f32 to vector<1x192x1xf32>
    %13 = arith.mulf %9, %12 : vector<1x192x1xf32>
    %14 = arith.mulf %11, %11 : vector<1x192x1xf32>
    %15 = arith.subf %13, %14 : vector<1x192x1xf32>
    %cst_7 = arith.constant 1.000000e-03 : f32
    %16 = vector.broadcast %cst_7 : f32 to vector<1x192x1xf32>
    %17 = arith.addf %15, %16 : vector<1x192x1xf32>
    %18 = math.rsqrt %17 : vector<1x192x1xf32>
    %c0_8 = arith.constant 0 : index
    %c0_9 = arith.constant 0 : index
    %c0_10 = arith.constant 0 : index
    %19 = vector.load %arg1[%c0_8, %c0_9, %c0_10] : memref<1x192x1xf32, #tpu.memory_space<vmem>>, vector<1x192x1xf32>
    %20 = arith.mulf %19, %18 : vector<1x192x1xf32>
    %c0_11 = arith.constant 0 : index
    %c0_12 = arith.constant 0 : index
    %c0_13 = arith.constant 0 : index
    %21 = vector.load %arg2[%c0_11, %c0_12, %c0_13] : memref<1x192x1xf32, #tpu.memory_space<vmem>>, vector<1x192x1xf32>
    %22 = arith.mulf %11, %20 : vector<1x192x1xf32>
    %23 = arith.subf %21, %22 : vector<1x192x1xf32>
    %24 = vector.broadcast %20 : vector<1x192x1xf32> to vector<1x192x196xf32>
    %25 = arith.mulf %0, %24 : vector<1x192x196xf32>
    %26 = vector.broadcast %23 : vector<1x192x1xf32> to vector<1x192x196xf32>
    %27 = arith.addf %25, %26 : vector<1x192x196xf32>
    %c0_14 = arith.constant 0 : index
    %c0_15 = arith.constant 0 : index
    %c0_16 = arith.constant 0 : index
    %28 = vector.load %arg3[%c0_14, %c0_15, %c0_16] : memref<1x192x196xf32, #tpu.memory_space<vmem>>, vector<1x192x196xf32>
    tpu.vector_store %arg3[%c0_14, %c0_15, %c0_16], %27 {strides = array<i32>} : memref<1x192x196xf32, #tpu.memory_space<vmem>>, vector<1x192x196xf32>,
    return
  }
}

</mosaic_0001>

<llo_original>
// kernel: tpu_custom_call.1
$region0: #{tpu_custom_call.1}
  #allocation0 [shape = 'u32[]', space=smem, size = 0x4, offset = 0x4, fixed_abs, tag = 'smem constant byte address 0x4 - core index']
  #allocation1 [shape = 'u32[144,128]{1,0:T(1,128)}', space=vmem, size = 0x12000, scoped, tag = 'internal scratch']
  %s0 = inlined_call_operand.vmem [shape: f32[1,192,196], index: 0, kind: input, shape index: {}]
  %s1 = inlined_call_operand.vmem [shape: f32[1,192,1], index: 1, kind: input, shape index: {}]
  %s2 = inlined_call_operand.vmem [shape: f32[1,192,1], index: 2, kind: input, shape index: {}]
  %s3 = inlined_call_operand.hbm [shape: f32[1,192,196], index: 3, kind: output, shape index: {}]
  %s4 = sld [smem:[#allocation0]]
  $region22: #{tpu_custom_call.1} parent=0
    _
  %s6 = ssub.s32 1, %s4
  %s7 = scalar_select 0, %s6, %s4
  $region1: #{tpu_custom_call.1} parent=0
    #allocation2 [shape = 'u8[196608]{0}', space=vmem, size = 0x30000, scoped, tag = 'output window, operand 0, single buffered']
    #allocation3 [shape = 's32[1]{0}', space=sflag, size = 0x4, scoped, tag = 'scoped memory for tpu_custom_call.1']
    %8 = vsyncpa [#allocation3], 0
    // Predicated region
    $region2: #{tpu_custom_call.1} parent=1 // pred_check
      _
    $region3: #{tpu_custom_call.1} parent=1 // pred_check_branch
      %10 = sbr.rel (0) target = $region5
    $region4: #{tpu_custom_call.1} parent=1 // pred_region
      _
    $region5: #{tpu_custom_call.1} parent=1 // pred_fallthru
      _
    // Predicated region
    $region6: #{tpu_custom_call.1} parent=1 // pred_check
      _
    $region7: #{tpu_custom_call.1} parent=1 // pred_check_branch
      %12 = sbr.rel (0) target = $region9
    $region8: #{tpu_custom_call.1} parent=1 // pred_region
      _
    $region9: #{tpu_custom_call.1} parent=1 // pred_fallthru
      _
    // Predicated region
    $region10: #{tpu_custom_call.1} parent=1 // pred_check
      _
    $region11: #{tpu_custom_call.1} parent=1 // pred_check_branch
      %14 = sbr.rel (0) target = $region13
    $region12: #{tpu_custom_call.1} parent=1 // pred_region
      _
    $region13: #{tpu_custom_call.1} parent=1 // pred_fallthru
      _
    %v15 = vld [vmem:[%s0] sm:$0xff]
    %v16 = vld [vmem:[%s0 + $0x8] sm:$0xff]
    %v17 = vld [vmem:[%s0 + $0x10] sm:$0xff]
    %v18 = vld [vmem:[%s0 + $0x18] sm:$0xff]
    %v19 = vld [vmem:[%s0 + $0x20] sm:$0xff]
    %v20 = vld [vmem:[%s0 + $0x28] sm:$0xff]
    %v21 = vld [vmem:[%s0 + $0x30] sm:$0xff]
    %v22 = vld [vmem:[%s0 + $0x38] sm:$0xff]
    %v23 = vld [vmem:[%s0 + $0x40] sm:$0xff]
    %v24 = vld [vmem:[%s0 + $0x48] sm:$0xff]
    %v25 = vld [vmem:[%s0 + $0x50] sm:$0xff]
    %v26 = vld [vmem:[%s0 + $0x58] sm:$0xff]
    %v27 = vld [vmem:[%s0 + $0x60] sm:$0xff]
    %v28 = vld [vmem:[%s0 + $0x68] sm:$0xff]
    %v29 = vld [vmem:[%s0 + $0x70] sm:$0xff]
    %v30 = vld [vmem:[%s0 + $0x78] sm:$0xff]
    %v31 = vld [vmem:[%s0 + $0x80] sm:$0xff]
    %v32 = vld [vmem:[%s0 + $0x88] sm:$0xff]
    %v33 = vld [vmem:[%s0 + $0x90] sm:$0xff]
    %v34 = vld [vmem:[%s0 + $0x98] sm:$0xff]
    %v35 = vld [vmem:[%s0 + $0xa0] sm:$0xff]
    %v36 = vld [vmem:[%s0 + $0xa8] sm:$0xff]
    %v37 = vld [vmem:[%s0 + $0xb0] sm:$0xff]
    %v38 = vld [vmem:[%s0 + $0xb8] sm:$0xff]
    %v39 = vld [vmem:[%s0 + $0xc0] sm:$0xff]
    %v40 = vld [vmem:[%s0 + $0xc8] sm:$0xff]
    %v41 = vld [vmem:[%s0 + $0xd0] sm:$0xff]
    %v42 = vld [vmem:[%s0 + $0xd8] sm:$0xff]
    %v43 = vld [vmem:[%s0 + $0xe0] sm:$0xff]
    %v44 = vld [vmem:[%s0 + $0xe8] sm:$0xff]
    %v45 = vld [vmem:[%s0 + $0xf0] sm:$0xff]
    %v46 = vld [vmem:[%s0 + $0xf8] sm:$0xff]
    %v47 = vld [vmem:[%s0 + $0x100] sm:$0xff]
    %v48 = vld [vmem:[%s0 + $0x108] sm:$0xff]
    %v49 = vld [vmem:[%s0 + $0x110] sm:$0xff]
    %v50 = vld [vmem:[%s0 + $0x118] sm:$0xff]
    %v51 = vld [vmem:[%s0 + $0x120] sm:$0xff]
    %v52 = vld [vmem:[%s0 + $0x128] sm:$0xff]
    %v53 = vld [vmem:[%s0 + $0x130] sm:$0xff]
    %v54 = vld [vmem:[%s0 + $0x138] sm:$0xff]
    %v55 = vld [vmem:[%s0 + $0x140] sm:$0xff]
    %v56 = vld [vmem:[%s0 + $0x148] sm:$0xff]
    %v57 = vld [vmem:[%s0 + $0x150] sm:$0xff]
    %v58 = vld [vmem:[%s0 + $0x158] sm:$0xff]
    %v59 = vld [vmem:[%s0 + $0x160] sm:$0xff]
    %v60 = vld [vmem:[%s0 + $0x168] sm:$0xff]
    %v61 = vld [vmem:[%s0 + $0x170] sm:$0xff]
    %v62 = vld [vmem:[%s0 + $0x178] sm:$0xff]
    %vm63 = vcmask 556032
    %v64 = vsel %vm63, %v16, 0.0
    %v65 = vadd.f32 %v15, %v64
    %66 = vadd.xlane.f32.xlu0 %v65
    %v67 = vpop.xlane.xlu0 %66
    %v68 = vsel %vm63, %v18, 0.0
    %v69 = vadd.f32 %v17, %v68
    %70 = vadd.xlane.f32.xlu0 %v69
    %v71 = vpop.xlane.xlu0 %70
    %v72 = vsel %vm63, %v20, 0.0
    %v73 = vadd.f32 %v19, %v72
    %74 = vadd.xlane.f32.xlu0 %v73
    %v75 = vpop.xlane.xlu0 %74
    %v76 = vsel %vm63, %v22, 0.0
    %v77 = vadd.f32 %v21, %v76
    %78 = vadd.xlane.f32.xlu0 %v77
    %v79 = vpop.xlane.xlu0 %78
    %v80 = vsel %vm63, %v24, 0.0
    %v81 = vadd.f32 %v23, %v80
    %82 = vadd.xlane.f32.xlu0 %v81
    %v83 = vpop.xlane.xlu0 %82
    %v84 = vsel %vm63, %v26, 0.0
    %v85 = vadd.f32 %v25, %v84
    %86 = vadd.xlane.f32.xlu0 %v85
    %v87 = vpop.xlane.xlu0 %86
    %v88 = vsel %vm63, %v28, 0.0
    %v89 = vadd.f32 %v27, %v88
    %90 = vadd.xlane.f32.xlu0 %v89
    %v91 = vpop.xlane.xlu0 %90
    %v92 = vsel %vm63, %v30, 0.0
    %v93 = vadd.f32 %v29, %v92
    %94 = vadd.xlane.f32.xlu0 %v93
    %v95 = vpop.xlane.xlu0 %94
    %v96 = vsel %vm63, %v32, 0.0
    %v97 = vadd.f32 %v31, %v96
    %98 = vadd.xlane.f32.xlu0 %v97
    %v99 = vpop.xlane.xlu0 %98
    %v100 = vsel %vm63, %v34, 0.0
    %v101 = vadd.f32 %v33, %v100
    %102 = vadd.xlane.f32.xlu0 %v101
    %v103 = vpop.xlane.xlu0 %102
    %v104 = vsel %vm63, %v36, 0.0
    %v105 = vadd.f32 %v35, %v104
    %106 = vadd.xlane.f32.xlu0 %v105
    %v107 = vpop.xlane.xlu0 %106
    %v108 = vsel %vm63, %v38, 0.0
    %v109 = vadd.f32 %v37, %v108
    %110 = vadd.xlane.f32.xlu0 %v109
    %v111 = vpop.xlane.xlu0 %110
    %v112 = vsel %vm63, %v40, 0.0
    %v113 = vadd.f32 %v39, %v112
    %114 = vadd.xlane.f32.xlu0 %v113
    %v115 = vpop.xlane.xlu0 %114
    %v116 = vsel %vm63, %v42, 0.0
    %v117 = vadd.f32 %v41, %v116
    %118 = vadd.xlane.f32.xlu0 %v117
    %v119 = vpop.xlane.xlu0 %118
    %v120 = vsel %vm63, %v44, 0.0
    %v121 = vadd.f32 %v43, %v120
    %122 = vadd.xlane.f32.xlu0 %v121
    %v123 = vpop.xlane.xlu0 %122
    %v124 = vsel %vm63, %v46, 0.0
    %v125 = vadd.f32 %v45, %v124
    %126 = vadd.xlane.f32.xlu0 %v125
    %v127 = vpop.xlane.xlu0 %126
    %v128 = vsel %vm63, %v48, 0.0
    %v129 = vadd.f32 %v47, %v128
    %130 = vadd.xlane.f32.xlu0 %v129
    %v131 = vpop.xlane.xlu0 %130
    %v132 = vsel %vm63, %v50, 0.0
    %v133 = vadd.f32 %v49, %v132
    %134 = vadd.xlane.f32.xlu0 %v133
    %v135 = vpop.xlane.xlu0 %134
    %v136 = vsel %vm63, %v52, 0.0
    %v137 = vadd.f32 %v51, %v136
    %138 = vadd.xlane.f32.xlu0 %v137
    %v139 = vpop.xlane.xlu0 %138
    %v140 = vsel %vm63, %v54, 0.0
    %v141 = vadd.f32 %v53, %v140
    %142 = vadd.xlane.f32.xlu0 %v141
    %v143 = vpop.xlane.xlu0 %142
    %v144 = vsel %vm63, %v56, 0.0
    %v145 = vadd.f32 %v55, %v144
    %146 = vadd.xlane.f32.xlu0 %v145
    %v147 = vpop.xlane.xlu0 %146
    %v148 = vsel %vm63, %v58, 0.0
    %v149 = vadd.f32 %v57, %v148
    %150 = vadd.xlane.f32.xlu0 %v149
    %v151 = vpop.xlane.xlu0 %150
    %v152 = vsel %vm63, %v60, 0.0
    %v153 = vadd.f32 %v59, %v152
    %154 = vadd.xlane.f32.xlu0 %v153
    %v155 = vpop.xlane.xlu0 %154
    %v156 = vsel %vm63, %v62, 0.0
    %v157 = vadd.f32 %v61, %v156
    %158 = vadd.xlane.f32.xlu0 %v157
    %v159 = vpop.xlane.xlu0 %158
    %v160 = vadd.f32 %v67, 0.0
    %v161 = vadd.f32 %v71, 0.0
    %v162 = vadd.f32 %v75, 0.0
    %v163 = vadd.f32 %v79, 0.0
    %v164 = vadd.f32 %v83, 0.0
    %v165 = vadd.f32 %v87, 0.0
    %v166 = vadd.f32 %v91, 0.0
    %v167 = vadd.f32 %v95, 0.0
    %v168 = vadd.f32 %v99, 0.0
    %v169 = vadd.f32 %v103, 0.0
    %v170 = vadd.f32 %v107, 0.0
    %v171 = vadd.f32 %v111, 0.0
    %v172 = vadd.f32 %v115, 0.0
    %v173 = vadd.f32 %v119, 0.0
    %v174 = vadd.f32 %v123, 0.0
    %v175 = vadd.f32 %v127, 0.0
    %v176 = vadd.f32 %v131, 0.0
    %v177 = vadd.f32 %v135, 0.0
    %v178 = vadd.f32 %v139, 0.0
    %v179 = vadd.f32 %v143, 0.0
    %v180 = vadd.f32 %v147, 0.0
    %v181 = vadd.f32 %v151, 0.0
    %v182 = vadd.f32 %v155, 0.0
    %v183 = vadd.f32 %v159, 0.0
    %v184 = vmul.f32 %v15, %v15
    %v185 = vmul.f32 %v16, %v16
    %v186 = vmul.f32 %v17, %v17
    %v187 = vmul.f32 %v18, %v18
    %v188 = vmul.f32 %v19, %v19
    %v189 = vmul.f32 %v20, %v20
    %v190 = vmul.f32 %v21, %v21
    %v191 = vmul.f32 %v22, %v22
    %v192 = vmul.f32 %v23, %v23
    %v193 = vmul.f32 %v24, %v24
    %v194 = vmul.f32 %v25, %v25
    %v195 = vmul.f32 %v26, %v26
    %v196 = vmul.f32 %v27, %v27
    %v197 = vmul.f32 %v28, %v28
    %v198 = vmul.f32 %v29, %v29
    %v199 = vmul.f32 %v30, %v30
    %v200 = vmul.f32 %v31, %v31
    %v201 = vmul.f32 %v32, %v32
    %v202 = vmul.f32 %v33, %v33
    %v203 = vmul.f32 %v34, %v34
    %v204 = vmul.f32 %v35, %v35
    %v205 = vmul.f32 %v36, %v36
    %v206 = vmul.f32 %v37, %v37
    %v207 = vmul.f32 %v38, %v38
    %v208 = vmul.f32 %v39, %v39
    %v209 = vmul.f32 %v40, %v40
    %v210 = vmul.f32 %v41, %v41
    %v211 = vmul.f32 %v42, %v42
    %v212 = vmul.f32 %v43, %v43
    %v213 = vmul.f32 %v44, %v44
    %v214 = vmul.f32 %v45, %v45
    %v215 = vmul.f32 %v46, %v46
    %v216 = vmul.f32 %v47, %v47
    %v217 = vmul.f32 %v48, %v48
    %v218 = vmul.f32 %v49, %v49
    %v219 = vmul.f32 %v50, %v50
    %v220 = vmul.f32 %v51, %v51
    %v221 = vmul.f32 %v52, %v52
    %v222 = vmul.f32 %v53, %v53
    %v223 = vmul.f32 %v54, %v54
    %v224 = vmul.f32 %v55, %v55
    %v225 = vmul.f32 %v56, %v56
    %v226 = vmul.f32 %v57, %v57
    %v227 = vmul.f32 %v58, %v58
    %v228 = vmul.f32 %v59, %v59
    %v229 = vmul.f32 %v60, %v60
    %v230 = vmul.f32 %v61, %v61
    %v231 = vmul.f32 %v62, %v62
    %v232 = vsel %vm63, %v185, 0.0
    %v233 = vadd.f32 %v184, %v232
    %234 = vadd.xlane.f32.xlu0 %v233
    %v235 = vpop.xlane.xlu0 %234
    %v236 = vsel %vm63, %v187, 0.0
    %v237 = vadd.f32 %v186, %v236
    %238 = vadd.xlane.f32.xlu0 %v237
    %v239 = vpop.xlane.xlu0 %238
    %v240 = vsel %vm63, %v189, 0.0
    %v241 = vadd.f32 %v188, %v240
    %242 = vadd.xlane.f32.xlu0 %v241
    %v243 = vpop.xlane.xlu0 %242
    %v244 = vsel %vm63, %v191, 0.0
    %v245 = vadd.f32 %v190, %v244
    %246 = vadd.xlane.f32.xlu0 %v245
    %v247 = vpop.xlane.xlu0 %246
    %v248 = vsel %vm63, %v193, 0.0
    %v249 = vadd.f32 %v192, %v248
    %250 = vadd.xlane.f32.xlu0 %v249
    %v251 = vpop.xlane.xlu0 %250
    %v252 = vsel %vm63, %v195, 0.0
    %v253 = vadd.f32 %v194, %v252
    %254 = vadd.xlane.f32.xlu0 %v253
    %v255 = vpop.xlane.xlu0 %254
    %v256 = vsel %vm63, %v197, 0.0
    %v257 = vadd.f32 %v196, %v256
    %258 = vadd.xlane.f32.xlu0 %v257
    %v259 = vpop.xlane.xlu0 %258
    %v260 = vsel %vm63, %v199, 0.0
    %v261 = vadd.f32 %v198, %v260
    %262 = vadd.xlane.f32.xlu0 %v261
    %v263 = vpop.xlane.xlu0 %262
    %v264 = vsel %vm63, %v201, 0.0
    %v265 = vadd.f32 %v200, %v264
    %266 = vadd.xlane.f32.xlu0 %v265
    %v267 = vpop.xlane.xlu0 %266
    %v268 = vsel %vm63, %v203, 0.0
    %v269 = vadd.f32 %v202, %v268
    %270 = vadd.xlane.f32.xlu0 %v269
    %v271 = vpop.xlane.xlu0 %270
    %v272 = vsel %vm63, %v205, 0.0
    %v273 = vadd.f32 %v204, %v272
    %274 = vadd.xlane.f32.xlu0 %v273
    %v275 = vpop.xlane.xlu0 %274
    %v276 = vsel %vm63, %v207, 0.0
    %v277 = vadd.f32 %v206, %v276
    %278 = vadd.xlane.f32.xlu0 %v277
    %v279 = vpop.xlane.xlu0 %278
    %v280 = vsel %vm63, %v209, 0.0
    %v281 = vadd.f32 %v208, %v280
    %282 = vadd.xlane.f32.xlu0 %v281
    %v283 = vpop.xlane.xlu0 %282
    %v284 = vsel %vm63, %v211, 0.0
    %v285 = vadd.f32 %v210, %v284
    %286 = vadd.xlane.f32.xlu0 %v285
    %v287 = vpop.xlane.xlu0 %286
    %v288 = vsel %vm63, %v213, 0.0
    %v289 = vadd.f32 %v212, %v288
    %290 = vadd.xlane.f32.xlu0 %v289
    %v291 = vpop.xlane.xlu0 %290
    %v292 = vsel %vm63, %v215, 0.0
    %v293 = vadd.f32 %v214, %v292
    %294 = vadd.xlane.f32.xlu0 %v293
    %v295 = vpop.xlane.xlu0 %294
    %v296 = vsel %vm63, %v217, 0.0
    %v297 = vadd.f32 %v216, %v296
    %298 = vadd.xlane.f32.xlu0 %v297
    %v299 = vpop.xlane.xlu0 %298
    %v300 = vsel %vm63, %v219, 0.0
    %v301 = vadd.f32 %v218, %v300
    %302 = vadd.xlane.f32.xlu0 %v301
    %v303 = vpop.xlane.xlu0 %302
    %v304 = vsel %vm63, %v221, 0.0
    %v305 = vadd.f32 %v220, %v304
    %306 = vadd.xlane.f32.xlu0 %v305
    %v307 = vpop.xlane.xlu0 %306
    %v308 = vsel %vm63, %v223, 0.0
    %v309 = vadd.f32 %v222, %v308
    %310 = vadd.xlane.f32.xlu0 %v309
    %v311 = vpop.xlane.xlu0 %310
    %v312 = vsel %vm63, %v225, 0.0
    %v313 = vadd.f32 %v224, %v312
    %314 = vadd.xlane.f32.xlu0 %v313
    %v315 = vpop.xlane.xlu0 %314
    %v316 = vsel %vm63, %v227, 0.0
    %v317 = vadd.f32 %v226, %v316
    %318 = vadd.xlane.f32.xlu0 %v317
    %v319 = vpop.xlane.xlu0 %318
    %v320 = vsel %vm63, %v229, 0.0
    %v321 = vadd.f32 %v228, %v320
    %322 = vadd.xlane.f32.xlu0 %v321
    %v323 = vpop.xlane.xlu0 %322
    %v324 = vsel %vm63, %v231, 0.0
    %v325 = vadd.f32 %v230, %v324
    %326 = vadd.xlane.f32.xlu0 %v325
    %v327 = vpop.xlane.xlu0 %326
    %v328 = vadd.f32 %v235, 0.0
    %v329 = vadd.f32 %v239, 0.0
    %v330 = vadd.f32 %v243, 0.0
    %v331 = vadd.f32 %v247, 0.0
    %v332 = vadd.f32 %v251, 0.0
    %v333 = vadd.f32 %v255, 0.0
    %v334 = vadd.f32 %v259, 0.0
    %v335 = vadd.f32 %v263, 0.0
    %v336 = vadd.f32 %v267, 0.0
    %v337 = vadd.f32 %v271, 0.0
    %v338 = vadd.f32 %v275, 0.0
    %v339 = vadd.f32 %v279, 0.0
    %v340 = vadd.f32 %v283, 0.0
    %v341 = vadd.f32 %v287, 0.0
    %v342 = vadd.f32 %v291, 0.0
    %v343 = vadd.f32 %v295, 0.0
    %v344 = vadd.f32 %v299, 0.0
    %v345 = vadd.f32 %v303, 0.0
    %v346 = vadd.f32 %v307, 0.0
    %v347 = vadd.f32 %v311, 0.0
    %v348 = vadd.f32 %v315, 0.0
    %v349 = vadd.f32 %v319, 0.0
    %v350 = vadd.f32 %v323, 0.0
    %v351 = vadd.f32 %v327, 0.0
    %v352 = vmul.f32 %v160, 0.0051020407
    %v353 = vmul.f32 %v161, 0.0051020407
    %v354 = vmul.f32 %v162, 0.0051020407
    %v355 = vmul.f32 %v163, 0.0051020407
    %v356 = vmul.f32 %v164, 0.0051020407
    %v357 = vmul.f32 %v165, 0.0051020407
    %v358 = vmul.f32 %v166, 0.0051020407
    %v359 = vmul.f32 %v167, 0.0051020407
    %v360 = vmul.f32 %v168, 0.0051020407
    %v361 = vmul.f32 %v169, 0.0051020407
    %v362 = vmul.f32 %v170, 0.0051020407
    %v363 = vmul.f32 %v171, 0.0051020407
    %v364 = vmul.f32 %v172, 0.0051020407
    %v365 = vmul.f32 %v173, 0.0051020407
    %v366 = vmul.f32 %v174, 0.0051020407
    %v367 = vmul.f32 %v175, 0.0051020407
    %v368 = vmul.f32 %v176, 0.0051020407
    %v369 = vmul.f32 %v177, 0.0051020407
    %v370 = vmul.f32 %v178, 0.0051020407
    %v371 = vmul.f32 %v179, 0.0051020407
    %v372 = vmul.f32 %v180, 0.0051020407
    %v373 = vmul.f32 %v181, 0.0051020407
    %v374 = vmul.f32 %v182, 0.0051020407
    %v375 = vmul.f32 %v183, 0.0051020407
    %v376 = vmul.f32 %v328, 0.0051020407
    %v377 = vmul.f32 %v329, 0.0051020407
    %v378 = vmul.f32 %v330, 0.0051020407
    %v379 = vmul.f32 %v331, 0.0051020407
    %v380 = vmul.f32 %v332, 0.0051020407
    %v381 = vmul.f32 %v333, 0.0051020407
    %v382 = vmul.f32 %v334, 0.0051020407
    %v383 = vmul.f32 %v335, 0.0051020407
    %v384 = vmul.f32 %v336, 0.0051020407
    %v385 = vmul.f32 %v337, 0.0051020407
    %v386 = vmul.f32 %v338, 0.0051020407
    %v387 = vmul.f32 %v339, 0.0051020407
    %v388 = vmul.f32 %v340, 0.0051020407
    %v389 = vmul.f32 %v341, 0.0051020407
    %v390 = vmul.f32 %v342, 0.0051020407
    %v391 = vmul.f32 %v343, 0.0051020407
    %v392 = vmul.f32 %v344, 0.0051020407
    %v393 = vmul.f32 %v345, 0.0051020407
    %v394 = vmul.f32 %v346, 0.0051020407
    %v395 = vmul.f32 %v347, 0.0051020407
    %v396 = vmul.f32 %v348, 0.0051020407
    %v397 = vmul.f32 %v349, 0.0051020407
    %v398 = vmul.f32 %v350, 0.0051020407
    %v399 = vmul.f32 %v351, 0.0051020407
    %v400 = vmul.f32 %v352, %v352
    %v401 = vmul.f32 %v353, %v353
    %v402 = vmul.f32 %v354, %v354
    %v403 = vmul.f32 %v355, %v355
    %v404 = vmul.f32 %v356, %v356
    %v405 = vmul.f32 %v357, %v357
    %v406 = vmul.f32 %v358, %v358
    %v407 = vmul.f32 %v359, %v359
    %v408 = vmul.f32 %v360, %v360
    %v409 = vmul.f32 %v361, %v361
    %v410 = vmul.f32 %v362, %v362
    %v411 = vmul.f32 %v363, %v363
    %v412 = vmul.f32 %v364, %v364
    %v413 = vmul.f32 %v365, %v365
    %v414 = vmul.f32 %v366, %v366
    %v415 = vmul.f32 %v367, %v367
    %v416 = vmul.f32 %v368, %v368
    %v417 = vmul.f32 %v369, %v369
    %v418 = vmul.f32 %v370, %v370
    %v419 = vmul.f32 %v371, %v371
    %v420 = vmul.f32 %v372, %v372
    %v421 = vmul.f32 %v373, %v373
    %v422 = vmul.f32 %v374, %v374
    %v423 = vmul.f32 %v375, %v375
    %v424 = vsub.f32 %v376, %v400
    %v425 = vsub.f32 %v377, %v401
    %v426 = vsub.f32 %v378, %v402
    %v427 = vsub.f32 %v379, %v403
    %v428 = vsub.f32 %v380, %v404
    %v429 = vsub.f32 %v381, %v405
    %v430 = vsub.f32 %v382, %v406
    %v431 = vsub.f32 %v383, %v407
    %v432 = vsub.f32 %v384, %v408
    %v433 = vsub.f32 %v385, %v409
    %v434 = vsub.f32 %v386, %v410
    %v435 = vsub.f32 %v387, %v411
    %v436 = vsub.f32 %v388, %v412
    %v437 = vsub.f32 %v389, %v413
    %v438 = vsub.f32 %v390, %v414
    %v439 = vsub.f32 %v391, %v415
    %v440 = vsub.f32 %v392, %v416
    %v441 = vsub.f32 %v393, %v417
    %v442 = vsub.f32 %v394, %v418
    %v443 = vsub.f32 %v395, %v419
    %v444 = vsub.f32 %v396, %v420
    %v445 = vsub.f32 %v397, %v421
    %v446 = vsub.f32 %v398, %v422
    %v447 = vsub.f32 %v399, %v423
    %v448 = vadd.f32 %v424, 0.001
    %v449 = vadd.f32 %v425, 0.001
    %v450 = vadd.f32 %v426, 0.001
    %v451 = vadd.f32 %v427, 0.001
    %v452 = vadd.f32 %v428, 0.001
    %v453 = vadd.f32 %v429, 0.001
    %v454 = vadd.f32 %v430, 0.001
    %v455 = vadd.f32 %v431, 0.001
    %v456 = vadd.f32 %v432, 0.001
    %v457 = vadd.f32 %v433, 0.001
    %v458 = vadd.f32 %v434, 0.001
    %v459 = vadd.f32 %v435, 0.001
    %v460 = vadd.f32 %v436, 0.001
    %v461 = vadd.f32 %v437, 0.001
    %v462 = vadd.f32 %v438, 0.001
    %v463 = vadd.f32 %v439, 0.001
    %v464 = vadd.f32 %v440, 0.001
    %v465 = vadd.f32 %v441, 0.001
    %v466 = vadd.f32 %v442, 0.001
    %v467 = vadd.f32 %v443, 0.001
    %v468 = vadd.f32 %v444, 0.001
    %v469 = vadd.f32 %v445, 0.001
    %v470 = vadd.f32 %v446, 0.001
    %v471 = vadd.f32 %v447, 0.001
    %v472 = vrsqrt.pop %v448
    %v473 = vrsqrt.pop %v449
    %v474 = vrsqrt.pop %v450
    %v475 = vrsqrt.pop %v451
    %v476 = vrsqrt.pop %v452
    %v477 = vrsqrt.pop %v453
    %v478 = vrsqrt.pop %v454
    %v479 = vrsqrt.pop %v455
    %v480 = vrsqrt.pop %v456
    %v481 = vrsqrt.pop %v457
    %v482 = vrsqrt.pop %v458
    %v483 = vrsqrt.pop %v459
    %v484 = vrsqrt.pop %v460
    %v485 = vrsqrt.pop %v461
    %v486 = vrsqrt.pop %v462
    %v487 = vrsqrt.pop %v463
    %v488 = vrsqrt.pop %v464
    %v489 = vrsqrt.pop %v465
    %v490 = vrsqrt.pop %v466
    %v491 = vrsqrt.pop %v467
    %v492 = vrsqrt.pop %v468
    %v493 = vrsqrt.pop %v469
    %v494 = vrsqrt.pop %v470
    %v495 = vrsqrt.pop %v471
    %v496 = vld [vmem:[%s1] sm:$0xff]
    %v497 = vld [vmem:[%s1 + $0x8] sm:$0xff]
    %v498 = vld [vmem:[%s1 + $0x10] sm:$0xff]
    %v499 = vld [vmem:[%s1 + $0x18] sm:$0xff]
    %v500 = vld [vmem:[%s1 + $0x20] sm:$0xff]
    %v501 = vld [vmem:[%s1 + $0x28] sm:$0xff]
    %v502 = vld [vmem:[%s1 + $0x30] sm:$0xff]
    %v503 = vld [vmem:[%s1 + $0x38] sm:$0xff]
    %v504 = vld [vmem:[%s1 + $0x40] sm:$0xff]
    %v505 = vld [vmem:[%s1 + $0x48] sm:$0xff]
    %v506 = vld [vmem:[%s1 + $0x50] sm:$0xff]
    %v507 = vld [vmem:[%s1 + $0x58] sm:$0xff]
    %v508 = vld [vmem:[%s1 + $0x60] sm:$0xff]
    %v509 = vld [vmem:[%s1 + $0x68] sm:$0xff]
    %v510 = vld [vmem:[%s1 + $0x70] sm:$0xff]
    %v511 = vld [vmem:[%s1 + $0x78] sm:$0xff]
    %v512 = vld [vmem:[%s1 + $0x80] sm:$0xff]
    %v513 = vld [vmem:[%s1 + $0x88] sm:$0xff]
    %v514 = vld [vmem:[%s1 + $0x90] sm:$0xff]
    %v515 = vld [vmem:[%s1 + $0x98] sm:$0xff]
    %v516 = vld [vmem:[%s1 + $0xa0] sm:$0xff]
    %v517 = vld [vmem:[%s1 + $0xa8] sm:$0xff]
    %v518 = vld [vmem:[%s1 + $0xb0] sm:$0xff]
    %v519 = vld [vmem:[%s1 + $0xb8] sm:$0xff]
    %v520 = vmul.f32 %v496, %v472
    %v521 = vmul.f32 %v497, %v473
    %v522 = vmul.f32 %v498, %v474
    %v523 = vmul.f32 %v499, %v475
    %v524 = vmul.f32 %v500, %v476
    %v525 = vmul.f32 %v501, %v477
    %v526 = vmul.f32 %v502, %v478
    %v527 = vmul.f32 %v503, %v479
    %v528 = vmul.f32 %v504, %v480
    %v529 = vmul.f32 %v505, %v481
    %v530 = vmul.f32 %v506, %v482
    %v531 = vmul.f32 %v507, %v483
    %v532 = vmul.f32 %v508, %v484
    %v533 = vmul.f32 %v509, %v485
    %v534 = vmul.f32 %v510, %v486
    %v535 = vmul.f32 %v511, %v487
    %v536 = vmul.f32 %v512, %v488
    %v537 = vmul.f32 %v513, %v489
    %v538 = vmul.f32 %v514, %v490
    %v539 = vmul.f32 %v515, %v491
    %v540 = vmul.f32 %v516, %v492
    %v541 = vmul.f32 %v517, %v493
    %v542 = vmul.f32 %v518, %v494
    %v543 = vmul.f32 %v519, %v495
    %v544 = vld [vmem:[%s2] sm:$0xff]
    %v545 = vld [vmem:[%s2 + $0x8] sm:$0xff]
    %v546 = vld [vmem:[%s2 + $0x10] sm:$0xff]
    %v547 = vld [vmem:[%s2 + $0x18] sm:$0xff]
    %v548 = vld [vmem:[%s2 + $0x20] sm:$0xff]
    %v549 = vld [vmem:[%s2 + $0x28] sm:$0xff]
    %v550 = vld [vmem:[%s2 + $0x30] sm:$0xff]
    %v551 = vld [vmem:[%s2 + $0x38] sm:$0xff]
    %v552 = vld [vmem:[%s2 + $0x40] sm:$0xff]
    %v553 = vld [vmem:[%s2 + $0x48] sm:$0xff]
    %v554 = vld [vmem:[%s2 + $0x50] sm:$0xff]
    %v555 = vld [vmem:[%s2 + $0x58] sm:$0xff]
    %v556 = vld [vmem:[%s2 + $0x60] sm:$0xff]
    %v557 = vld [vmem:[%s2 + $0x68] sm:$0xff]
    %v558 = vld [vmem:[%s2 + $0x70] sm:$0xff]
    %v559 = vld [vmem:[%s2 + $0x78] sm:$0xff]
    %v560 = vld [vmem:[%s2 + $0x80] sm:$0xff]
    %v561 = vld [vmem:[%s2 + $0x88] sm:$0xff]
    %v562 = vld [vmem:[%s2 + $0x90] sm:$0xff]
    %v563 = vld [vmem:[%s2 + $0x98] sm:$0xff]
    %v564 = vld [vmem:[%s2 + $0xa0] sm:$0xff]
    %v565 = vld [vmem:[%s2 + $0xa8] sm:$0xff]
    %v566 = vld [vmem:[%s2 + $0xb0] sm:$0xff]
    %v567 = vld [vmem:[%s2 + $0xb8] sm:$0xff]
    %v568 = vmul.f32 %v352, %v520
    %v569 = vmul.f32 %v353, %v521
    %v570 = vmul.f32 %v354, %v522
    %v571 = vmul.f32 %v355, %v523
    %v572 = vmul.f32 %v356, %v524
    %v573 = vmul.f32 %v357, %v525
    %v574 = vmul.f32 %v358, %v526
    %v575 = vmul.f32 %v359, %v527
    %v576 = vmul.f32 %v360, %v528
    %v577 = vmul.f32 %v361, %v529
    %v578 = vmul.f32 %v362, %v530
    %v579 = vmul.f32 %v363, %v531
    %v580 = vmul.f32 %v364, %v532
    %v581 = vmul.f32 %v365, %v533
    %v582 = vmul.f32 %v366, %v534
    %v583 = vmul.f32 %v367, %v535
    %v584 = vmul.f32 %v368, %v536
    %v585 = vmul.f32 %v369, %v537
    %v586 = vmul.f32 %v370, %v538
    %v587 = vmul.f32 %v371, %v539
    %v588 = vmul.f32 %v372, %v540
    %v589 = vmul.f32 %v373, %v541
    %v590 = vmul.f32 %v374, %v542
    %v591 = vmul.f32 %v375, %v543
    %v592 = vsub.f32 %v544, %v568
    %v593 = vsub.f32 %v545, %v569
    %v594 = vsub.f32 %v546, %v570
    %v595 = vsub.f32 %v547, %v571
    %v596 = vsub.f32 %v548, %v572
    %v597 = vsub.f32 %v549, %v573
    %v598 = vsub.f32 %v550, %v574
    %v599 = vsub.f32 %v551, %v575
    %v600 = vsub.f32 %v552, %v576
    %v601 = vsub.f32 %v553, %v577
    %v602 = vsub.f32 %v554, %v578
    %v603 = vsub.f32 %v555, %v579
    %v604 = vsub.f32 %v556, %v580
    %v605 = vsub.f32 %v557, %v581
    %v606 = vsub.f32 %v558, %v582
    %v607 = vsub.f32 %v559, %v583
    %v608 = vsub.f32 %v560, %v584
    %v609 = vsub.f32 %v561, %v585
    %v610 = vsub.f32 %v562, %v586
    %v611 = vsub.f32 %v563, %v587
    %v612 = vsub.f32 %v564, %v588
    %v613 = vsub.f32 %v565, %v589
    %v614 = vsub.f32 %v566, %v590
    %v615 = vsub.f32 %v567, %v591
    %617 = vset.pattern.permute.xlu0 0
    %618 = vperm.xlu0 %617, %v520
    %v619 = vpop.permute.xlu0 %618
    %622 = vset.pattern.permute.xlu0 0
    %623 = vperm.xlu0 %622, %v521
    %v624 = vpop.permute.xlu0 %623
    %627 = vset.pattern.permute.xlu0 0
    %628 = vperm.xlu0 %627, %v522
    %v629 = vpop.permute.xlu0 %628
    %632 = vset.pattern.permute.xlu0 0
    %633 = vperm.xlu0 %632, %v523
    %v634 = vpop.permute.xlu0 %633
    %637 = vset.pattern.permute.xlu0 0
    %638 = vperm.xlu0 %637, %v524
    %v639 = vpop.permute.xlu0 %638
    %642 = vset.pattern.permute.xlu0 0
    %643 = vperm.xlu0 %642, %v525
    %v644 = vpop.permute.xlu0 %643
    %647 = vset.pattern.permute.xlu0 0
    %648 = vperm.xlu0 %647, %v526
    %v649 = vpop.permute.xlu0 %648
    %652 = vset.pattern.permute.xlu0 0
    %653 = vperm.xlu0 %652, %v527
    %v654 = vpop.permute.xlu0 %653
    %657 = vset.pattern.permute.xlu0 0
    %658 = vperm.xlu0 %657, %v528
    %v659 = vpop.permute.xlu0 %658
    %662 = vset.pattern.permute.xlu0 0
    %663 = vperm.xlu0 %662, %v529
    %v664 = vpop.permute.xlu0 %663
    %667 = vset.pattern.permute.xlu0 0
    %668 = vperm.xlu0 %667, %v530
    %v669 = vpop.permute.xlu0 %668
    %672 = vset.pattern.permute.xlu0 0
    %673 = vperm.xlu0 %672, %v531
    %v674 = vpop.permute.xlu0 %673
    %677 = vset.pattern.permute.xlu0 0
    %678 = vperm.xlu0 %677, %v532
    %v679 = vpop.permute.xlu0 %678
    %682 = vset.pattern.permute.xlu0 0
    %683 = vperm.xlu0 %682, %v533
    %v684 = vpop.permute.xlu0 %683
    %687 = vset.pattern.permute.xlu0 0
    %688 = vperm.xlu0 %687, %v534
    %v689 = vpop.permute.xlu0 %688
    %692 = vset.pattern.permute.xlu0 0
    %693 = vperm.xlu0 %692, %v535
    %v694 = vpop.permute.xlu0 %693
    %697 = vset.pattern.permute.xlu0 0
    %698 = vperm.xlu0 %697, %v536
    %v699 = vpop.permute.xlu0 %698
    %702 = vset.pattern.permute.xlu0 0
    %703 = vperm.xlu0 %702, %v537
    %v704 = vpop.permute.xlu0 %703
    %707 = vset.pattern.permute.xlu0 0
    %708 = vperm.xlu0 %707, %v538
    %v709 = vpop.permute.xlu0 %708
    %712 = vset.pattern.permute.xlu0 0
    %713 = vperm.xlu0 %712, %v539
    %v714 = vpop.permute.xlu0 %713
    %717 = vset.pattern.permute.xlu0 0
    %718 = vperm.xlu0 %717, %v540
    %v719 = vpop.permute.xlu0 %718
    %722 = vset.pattern.permute.xlu0 0
    %723 = vperm.xlu0 %722, %v541
    %v724 = vpop.permute.xlu0 %723
    %727 = vset.pattern.permute.xlu0 0
    %728 = vperm.xlu0 %727, %v542
    %v729 = vpop.permute.xlu0 %728
    %732 = vset.pattern.permute.xlu0 0
    %733 = vperm.xlu0 %732, %v543
    %v734 = vpop.permute.xlu0 %733
    %v736 = vmul.f32 %v15, %v619
    %v737 = vmul.f32 %v16, %v619
    %v738 = vmul.f32 %v17, %v624
    %v739 = vmul.f32 %v18, %v624
    %v740 = vmul.f32 %v19, %v629
    %v741 = vmul.f32 %v20, %v629
    %v742 = vmul.f32 %v21, %v634
    %v743 = vmul.f32 %v22, %v634
    %v744 = vmul.f32 %v23, %v639
    %v745 = vmul.f32 %v24, %v639
    %v746 = vmul.f32 %v25, %v644
    %v747 = vmul.f32 %v26, %v644
    %v748 = vmul.f32 %v27, %v649
    %v749 = vmul.f32 %v28, %v649
    %v750 = vmul.f32 %v29, %v654
    %v751 = vmul.f32 %v30, %v654
    %v752 = vmul.f32 %v31, %v659
    %v753 = vmul.f32 %v32, %v659
    %v754 = vmul.f32 %v33, %v664
    %v755 = vmul.f32 %v34, %v664
    %v756 = vmul.f32 %v35, %v669
    %v757 = vmul.f32 %v36, %v669
    %v758 = vmul.f32 %v37, %v674
    %v759 = vmul.f32 %v38, %v674
    %v760 = vmul.f32 %v39, %v679
    %v761 = vmul.f32 %v40, %v679
    %v762 = vmul.f32 %v41, %v684
    %v763 = vmul.f32 %v42, %v684
    %v764 = vmul.f32 %v43, %v689
    %v765 = vmul.f32 %v44, %v689
    %v766 = vmul.f32 %v45, %v694
    %v767 = vmul.f32 %v46, %v694
    %v768 = vmul.f32 %v47, %v699
    %v769 = vmul.f32 %v48, %v699
    %v770 = vmul.f32 %v49, %v704
    %v771 = vmul.f32 %v50, %v704
    %v772 = vmul.f32 %v51, %v709
    %v773 = vmul.f32 %v52, %v709
    %v774 = vmul.f32 %v53, %v714
    %v775 = vmul.f32 %v54, %v714
    %v776 = vmul.f32 %v55, %v719
    %v777 = vmul.f32 %v56, %v719
    %v778 = vmul.f32 %v57, %v724
    %v779 = vmul.f32 %v58, %v724
    %v780 = vmul.f32 %v59, %v729
    %v781 = vmul.f32 %v60, %v729
    %v782 = vmul.f32 %v61, %v734
    %v783 = vmul.f32 %v62, %v734
    %785 = vset.pattern.permute.xlu0 0
    %786 = vperm.xlu0 %785, %v592
    %v787 = vpop.permute.xlu0 %786
    %790 = vset.pattern.permute.xlu0 0
    %791 = vperm.xlu0 %790, %v593
    %v792 = vpop.permute.xlu0 %791
    %795 = vset.pattern.permute.xlu0 0
    %796 = vperm.xlu0 %795, %v594
    %v797 = vpop.permute.xlu0 %796
    %800 = vset.pattern.permute.xlu0 0
    %801 = vperm.xlu0 %800, %v595
    %v802 = vpop.permute.xlu0 %801
    %805 = vset.pattern.permute.xlu0 0
    %806 = vperm.xlu0 %805, %v596
    %v807 = vpop.permute.xlu0 %806
    %810 = vset.pattern.permute.xlu0 0
    %811 = vperm.xlu0 %810, %v597
    %v812 = vpop.permute.xlu0 %811
    %815 = vset.pattern.permute.xlu0 0
    %816 = vperm.xlu0 %815, %v598
    %v817 = vpop.permute.xlu0 %816
    %820 = vset.pattern.permute.xlu0 0
    %821 = vperm.xlu0 %820, %v599
    %v822 = vpop.permute.xlu0 %821
    %825 = vset.pattern.permute.xlu0 0
    %826 = vperm.xlu0 %825, %v600
    %v827 = vpop.permute.xlu0 %826
    %830 = vset.pattern.permute.xlu0 0
    %831 = vperm.xlu0 %830, %v601
    %v832 = vpop.permute.xlu0 %831
    %835 = vset.pattern.permute.xlu0 0
    %836 = vperm.xlu0 %835, %v602
    %v837 = vpop.permute.xlu0 %836
    %840 = vset.pattern.permute.xlu0 0
    %841 = vperm.xlu0 %840, %v603
    %v842 = vpop.permute.xlu0 %841
    %845 = vset.pattern.permute.xlu0 0
    %846 = vperm.xlu0 %845, %v604
    %v847 = vpop.permute.xlu0 %846
    %850 = vset.pattern.permute.xlu0 0
    %851 = vperm.xlu0 %850, %v605
    %v852 = vpop.permute.xlu0 %851
    %855 = vset.pattern.permute.xlu0 0
    %856 = vperm.xlu0 %855, %v606
    %v857 = vpop.permute.xlu0 %856
    %860 = vset.pattern.permute.xlu0 0
    %861 = vperm.xlu0 %860, %v607
    %v862 = vpop.permute.xlu0 %861
    %865 = vset.pattern.permute.xlu0 0
    %866 = vperm.xlu0 %865, %v608
    %v867 = vpop.permute.xlu0 %866
    %870 = vset.pattern.permute.xlu0 0
    %871 = vperm.xlu0 %870, %v609
    %v872 = vpop.permute.xlu0 %871
    %875 = vset.pattern.permute.xlu0 0
    %876 = vperm.xlu0 %875, %v610
    %v877 = vpop.permute.xlu0 %876
    %880 = vset.pattern.permute.xlu0 0
    %881 = vperm.xlu0 %880, %v611
    %v882 = vpop.permute.xlu0 %881
    %885 = vset.pattern.permute.xlu0 0
    %886 = vperm.xlu0 %885, %v612
    %v887 = vpop.permute.xlu0 %886
    %890 = vset.pattern.permute.xlu0 0
    %891 = vperm.xlu0 %890, %v613
    %v892 = vpop.permute.xlu0 %891
    %895 = vset.pattern.permute.xlu0 0
    %896 = vperm.xlu0 %895, %v614
    %v897 = vpop.permute.xlu0 %896
    %900 = vset.pattern.permute.xlu0 0
    %901 = vperm.xlu0 %900, %v615
    %v902 = vpop.permute.xlu0 %901
    %v904 = vadd.f32 %v736, %v787
    %v905 = vadd.f32 %v737, %v787
    %v906 = vadd.f32 %v738, %v792
    %v907 = vadd.f32 %v739, %v792
    %v908 = vadd.f32 %v740, %v797
    %v909 = vadd.f32 %v741, %v797
    %v910 = vadd.f32 %v742, %v802
    %v911 = vadd.f32 %v743, %v802
    %v912 = vadd.f32 %v744, %v807
    %v913 = vadd.f32 %v745, %v807
    %v914 = vadd.f32 %v746, %v812
    %v915 = vadd.f32 %v747, %v812
    %v916 = vadd.f32 %v748, %v817
    %v917 = vadd.f32 %v749, %v817
    %v918 = vadd.f32 %v750, %v822
    %v919 = vadd.f32 %v751, %v822
    %v920 = vadd.f32 %v752, %v827
    %v921 = vadd.f32 %v753, %v827
    %v922 = vadd.f32 %v754, %v832
    %v923 = vadd.f32 %v755, %v832
    %v924 = vadd.f32 %v756, %v837
    %v925 = vadd.f32 %v757, %v837
    %v926 = vadd.f32 %v758, %v842
    %v927 = vadd.f32 %v759, %v842
    %v928 = vadd.f32 %v760, %v847
    %v929 = vadd.f32 %v761, %v847
    %v930 = vadd.f32 %v762, %v852
    %v931 = vadd.f32 %v763, %v852
    %v932 = vadd.f32 %v764, %v857
    %v933 = vadd.f32 %v765, %v857
    %v934 = vadd.f32 %v766, %v862
    %v935 = vadd.f32 %v767, %v862
    %v936 = vadd.f32 %v768, %v867
    %v937 = vadd.f32 %v769, %v867
    %v938 = vadd.f32 %v770, %v872
    %v939 = vadd.f32 %v771, %v872
    %v940 = vadd.f32 %v772, %v877
    %v941 = vadd.f32 %v773, %v877
    %v942 = vadd.f32 %v774, %v882
    %v943 = vadd.f32 %v775, %v882
    %v944 = vadd.f32 %v776, %v887
    %v945 = vadd.f32 %v777, %v887
    %v946 = vadd.f32 %v778, %v892
    %v947 = vadd.f32 %v779, %v892
    %v948 = vadd.f32 %v780, %v897
    %v949 = vadd.f32 %v781, %v897
    %v950 = vadd.f32 %v782, %v902
    %v951 = vadd.f32 %v783, %v902
    %952 = vst [vmem:[#allocation2] sm:$0xff] %v904
    %953 = vst.msk [vmem:[#allocation2 + $0x8] sm:$0xff] %vm63, %v905
    %954 = vst [vmem:[#allocation2 + $0x10] sm:$0xff] %v906
    %955 = vst.msk [vmem:[#allocation2 + $0x18] sm:$0xff] %vm63, %v907
    %956 = vst [vmem:[#allocation2 + $0x20] sm:$0xff] %v908
    %957 = vst.msk [vmem:[#allocation2 + $0x28] sm:$0xff] %vm63, %v909
    %958 = vst [vmem:[#allocation2 + $0x30] sm:$0xff] %v910
    %959 = vst.msk [vmem:[#allocation2 + $0x38] sm:$0xff] %vm63, %v911
    %960 = vst [vmem:[#allocation2 + $0x40] sm:$0xff] %v912
    %961 = vst.msk [vmem:[#allocation2 + $0x48] sm:$0xff] %vm63, %v913
    %962 = vst [vmem:[#allocation2 + $0x50] sm:$0xff] %v914
    %963 = vst.msk [vmem:[#allocation2 + $0x58] sm:$0xff] %vm63, %v915
    %964 = vst [vmem:[#allocation2 + $0x60] sm:$0xff] %v916
    %965 = vst.msk [vmem:[#allocation2 + $0x68] sm:$0xff] %vm63, %v917
    %966 = vst [vmem:[#allocation2 + $0x70] sm:$0xff] %v918
    %967 = vst.msk [vmem:[#allocation2 + $0x78] sm:$0xff] %vm63, %v919
    %968 = vst [vmem:[#allocation2 + $0x80] sm:$0xff] %v920
    %969 = vst.msk [vmem:[#allocation2 + $0x88] sm:$0xff] %vm63, %v921
    %970 = vst [vmem:[#allocation2 + $0x90] sm:$0xff] %v922
    %971 = vst.msk [vmem:[#allocation2 + $0x98] sm:$0xff] %vm63, %v923
    %972 = vst [vmem:[#allocation2 + $0xa0] sm:$0xff] %v924
    %973 = vst.msk [vmem:[#allocation2 + $0xa8] sm:$0xff] %vm63, %v925
    %974 = vst [vmem:[#allocation2 + $0xb0] sm:$0xff] %v926
    %975 = vst.msk [vmem:[#allocation2 + $0xb8] sm:$0xff] %vm63, %v927
    %976 = vst [vmem:[#allocation2 + $0xc0] sm:$0xff] %v928
    %977 = vst.msk [vmem:[#allocation2 + $0xc8] sm:$0xff] %vm63, %v929
    %978 = vst [vmem:[#allocation2 + $0xd0] sm:$0xff] %v930
    %979 = vst.msk [vmem:[#allocation2 + $0xd8] sm:$0xff] %vm63, %v931
    %980 = vst [vmem:[#allocation2 + $0xe0] sm:$0xff] %v932
    %981 = vst.msk [vmem:[#allocation2 + $0xe8] sm:$0xff] %vm63, %v933
    %982 = vst [vmem:[#allocation2 + $0xf0] sm:$0xff] %v934
    %983 = vst.msk [vmem:[#allocation2 + $0xf8] sm:$0xff] %vm63, %v935
    %984 = vst [vmem:[#allocation2 + $0x100] sm:$0xff] %v936
    %985 = vst.msk [vmem:[#allocation2 + $0x108] sm:$0xff] %vm63, %v937
    %986 = vst [vmem:[#allocation2 + $0x110] sm:$0xff] %v938
    %987 = vst.msk [vmem:[#allocation2 + $0x118] sm:$0xff] %vm63, %v939
    %988 = vst [vmem:[#allocation2 + $0x120] sm:$0xff] %v940
    %989 = vst.msk [vmem:[#allocation2 + $0x128] sm:$0xff] %vm63, %v941
    %990 = vst [vmem:[#allocation2 + $0x130] sm:$0xff] %v942
    %991 = vst.msk [vmem:[#allocation2 + $0x138] sm:$0xff] %vm63, %v943
    %992 = vst [vmem:[#allocation2 + $0x140] sm:$0xff] %v944
    %993 = vst.msk [vmem:[#allocation2 + $0x148] sm:$0xff] %vm63, %v945
    %994 = vst [vmem:[#allocation2 + $0x150] sm:$0xff] %v946
    %995 = vst.msk [vmem:[#allocation2 + $0x158] sm:$0xff] %vm63, %v947
    %996 = vst [vmem:[#allocation2 + $0x160] sm:$0xff] %v948
    %997 = vst.msk [vmem:[#allocation2 + $0x168] sm:$0xff] %vm63, %v949
    %998 = vst [vmem:[#allocation2 + $0x170] sm:$0xff] %v950
    %999 = vst.msk [vmem:[#allocation2 + $0x178] sm:$0xff] %vm63, %v951
    // Predicated region
    $region14: #{tpu_custom_call.1} parent=1 // pred_check
      _
    $region15: #{tpu_custom_call.1} parent=1 // pred_check_branch
      %1001 = sbr.rel (0) target = $region17
    $region16: #{tpu_custom_call.1} parent=1 // pred_region
      %s1003 = ssub.s32 6144, 6144
      %1004 = vsyncadd [#allocation3], %s1003
      %s1005 = sshll.u32 [#allocation2], 4
      %s1006 = int_to_ptr.vmem [resolvable:$true] %s1005
      %1011 = dma.vmem_to_hbm [thread:$0]  %s1006, 6144, %s3, [#allocation3], 256, 256, 16
    $region17: #{tpu_custom_call.1} parent=1 // pred_fallthru
      _
    // Predicated region
    $region18: #{tpu_custom_call.1} parent=1 // pred_check
      _
    $region19: #{tpu_custom_call.1} parent=1 // pred_check_branch
      %1013 = sbr.rel (0) target = $region21
    $region20: #{tpu_custom_call.1} parent=1 // pred_region
      %1014 = dma.done [#allocation3], 6144
    $region21: #{tpu_custom_call.1} parent=1 // pred_fallthru
      _
    %1015 = vsyncpa [#allocation3], 1

</llo_original>
